<compile_context>
chip_gen: v7x
topology: tpu7x:2x2x1
jax: 0.10.0
libtpu: 0.0.40
codegen_flags: <defaults>
</compile_context>

<pallas_src>
import functools

import jax
import jax.numpy as jnp
import numpy as np
from jax import lax
from jax.experimental import pallas as pl
from jax.experimental.pallas import tpu as pltpu


def embeddings_kernel(patches_ref, w_ref, addend_ref, out_ref):
    # patches_ref: (1, ts, K_pad) bf16 patch rows (row 0 of each batch is the zero "cls" row)
    # w_ref:       (K_pad, H)     bf16 full projection matrix (constant index_map -> VMEM resident)
    # addend_ref:  (ts, H)        f32  fused conv-bias + position-embedding (+cls on row 0)
    # out_ref:     (1, ts, H)     output rows
    acc = jnp.dot(patches_ref[0], w_ref[...], preferred_element_type=jnp.float32)
    out_ref[0] = (acc + addend_ref[...]).astype(out_ref.dtype)


def _round_up(x, m):
    return (x + m - 1) // m * m


@functools.partial(jax.jit, static_argnames=("patch_size", "out_dtype"))
def vit_embeddings(x, conv_w, conv_b, cls_token, pos_emb, *, patch_size,
                   out_dtype=jnp.float32):
    """x: (B, C, H, W) float32 (NCHW, same as PyTorch). Returns (B, n_patches+1, hidden)."""
    B, C, H, W = x.shape
    ph = pw = patch_size
    gh, gw = H // ph, W // pw
    n_patches = gh * gw
    hidden = conv_w.shape[0]
    K = C * ph * pw
    S = n_patches + 1                        # sequence length incl. cls row

    compute_dtype = jnp.bfloat16

    # --- seq tiling: multiple of 8, capped at 512; ensure >=2 parallel blocks for dual-TC chips ---
    ts = min(_round_up(S, 8), 512)
    if B == 1 and S <= 512 and ts > 8:       # single tile otherwise -> halve so both TCs get work
        ts = _round_up((ts + 1) // 2, 8)
    S_pad = _round_up(S, ts)
    n_seq_tiles = S_pad // ts

    # --- glue: bf16 cast early, non-overlapping patches in (c, u, v) order (matches conv weights) ---
    xb = x.astype(compute_dtype)
    patches = xb.reshape(B, C, gh, ph, gw, pw)
    patches = patches.transpose(0, 2, 4, 1, 3, 5).reshape(B, n_patches, K)

    # Lane-align K; prepend one zero row per batch (cls slot) and pad seq to S_pad.
    K_pad = _round_up(K, 128)
    patches_p = jnp.pad(patches, ((0, 0), (1, S_pad - S), (0, K_pad - K)))

    # conv weight (hidden, C, ph, pw) -> (K_pad, hidden), zero-padded rows, bf16. Fits VMEM; DMA'd once.
    w_mat = conv_w.reshape(hidden, K).T
    w_mat = jnp.pad(w_mat, ((0, K_pad - K), (0, 0))).astype(compute_dtype)

    # Fold conv bias + position embeddings + cls token into one per-row f32 addend, padded to S_pad.
    pos = pos_emb.reshape(S, hidden).astype(jnp.float32)
    addend = pos + conv_b.reshape(1, hidden).astype(jnp.float32)
    addend = addend.at[0, :].set(pos[0] + cls_token.reshape(hidden).astype(jnp.float32))
    addend = jnp.pad(addend, ((0, S_pad - S), (0, 0)))

    grid = (n_seq_tiles, B)                  # seq tiles OUTERMOST so addend index is batch-invariant

    out = pl.pallas_call(
        embeddings_kernel,
        out_shape=jax.ShapeDtypeStruct((B, S_pad, hidden), out_dtype),
        grid=grid,
        in_specs=[
            pl.BlockSpec((1, ts, K_pad), lambda s, b: (b, s, 0)),
            pl.BlockSpec((K_pad, hidden), lambda s, b: (0, 0)),   # constant -> fetched once
            pl.BlockSpec((ts, hidden), lambda s, b: (s, 0)),
        ],
        out_specs=pl.BlockSpec((1, ts, hidden), lambda s, b: (b, s, 0)),
        compiler_params=pltpu.CompilerParams(
            dimension_semantics=("parallel", "parallel"),
            vmem_limit_bytes=48 * 1024 * 1024,   # safe on v7x (64 MiB physical); ample for v5e/v6e
        ),
    )(patches_p, w_mat, addend)

    return out[:, :S, :]


def reference_embeddings(x, conv_w, conv_b, cls_token, pos_emb, *, patch_size):
    """Pure-JAX f32 reference mirroring the PyTorch forward (conv -> flatten -> transpose -> cat -> add)."""
    B = x.shape[0]
    hidden = conv_w.shape[0]
    y = lax.conv_general_dilated(
        x, conv_w,
        window_strides=(patch_size, patch_size),
        padding="VALID",
        dimension_numbers=("NCHW", "OIHW", "NCHW"),
    ) + conv_b.reshape(1, hidden, 1, 1)
    y = y.reshape(B, hidden, -1)             # flatten(2)
    y = jnp.transpose(y, (0, 2, 1))          # transpose(-1, -2)
    cls = jnp.broadcast_to(cls_token, (B, 1, hidden))
    y = jnp.concatenate([cls, y], axis=1)
    return y + pos_emb


if __name__ == "__main__":
    # Small config consistent with the module: img 16x16, patch 4 -> 16 patches, hidden 32.
    B, C, IMG, PATCH, HIDDEN = 2, 3, 16, 4, 32
    n_patches = (IMG // PATCH) * (IMG // PATCH)

    key = jax.random.PRNGKey(0)
    kx, kw, kb, kc, kp = jax.random.split(key, 5)

    x = jax.random.normal(kx, (B, C, IMG, IMG), dtype=jnp.float32)
    conv_w = jax.random.normal(kw, (HIDDEN, C, PATCH, PATCH), dtype=jnp.float32) * 0.02
    conv_b = jax.random.normal(kb, (HIDDEN,), dtype=jnp.float32) * 0.02
    cls_token = jax.random.normal(kc, (1, 1, HIDDEN), dtype=jnp.float32) * 0.02
    pos_emb = jax.random.normal(kp, (1, n_patches + 1, HIDDEN), dtype=jnp.float32) * 0.02

    out = vit_embeddings(x, conv_w, conv_b, cls_token, pos_emb, patch_size=PATCH)
    out = jax.block_until_ready(out)

    ref = reference_embeddings(x, conv_w, conv_b, cls_token, pos_emb, patch_size=PATCH)
    # Tolerance loosened vs an f32-only GEMM: operands are bf16 (f32 accumulation).
    np.testing.assert_allclose(np.asarray(out), np.asarray(ref), rtol=2e-2, atol=2e-2)

    assert out.shape == (B, n_patches + 1, HIDDEN)
    print("KERNEL_OK")
</pallas_src>

<mosaic_0001>
module attributes {stable_mosaic.version = 11 : i64} {
  func.func @embeddings_kernel(%arg0: i32, %arg1: i32, %arg2: memref<1x24x128xbf16, #tpu.memory_space<vmem>>, %arg3: memref<128x32xbf16, #tpu.memory_space<vmem>>, %arg4: memref<24x32xf32, #tpu.memory_space<vmem>>, %arg5: memref<1x24x32xf32, #tpu.memory_space<vmem>>) attributes {dimension_semantics = [#tpu.dimension_semantics<parallel>, #tpu.dimension_semantics<parallel>], iteration_bounds = array<i64: 1, 2>, scalar_prefetch = 0 : i64, scratch_operands = 0 : i64, tpu.core_type = #tpu.core_type<tc>, window_params = [{transform_indices = @transform_0, window_bounds = array<i64: 1, 24, 128>}, {pipeline_mode = #tpu.pipeline_mode<synchronous>, transform_indices = @transform_1, window_bounds = array<i64: 128, 32>}, {transform_indices = @transform_2, window_bounds = array<i64: 24, 32>}, {transform_indices = @transform_3, window_bounds = array<i64: 1, 24, 32>}]} {
    %c0 = arith.constant 0 : index
    %c0_0 = arith.constant 0 : index
    %c0_1 = arith.constant 0 : index
    %0 = vector.load %arg2[%c0, %c0_0, %c0_1] : memref<1x24x128xbf16, #tpu.memory_space<vmem>>, vector<1x24x128xbf16>
    %1 = vector.shape_cast %0 : vector<1x24x128xbf16> to vector<24x128xbf16>
    %c0_2 = arith.constant 0 : index
    %c0_3 = arith.constant 0 : index
    %2 = vector.load %arg3[%c0_2, %c0_3] : memref<128x32xbf16, #tpu.memory_space<vmem>>, vector<128x32xbf16>
    %cst = arith.constant dense<0.000000e+00> : vector<24x32xf32>
    %3 = tpu.matmul %1, %2, %cst {dimension_numbers = #tpu.dot_dimension_numbers<[1], [0], [0], [1], [0, 0, 1, 1], [], []>} : vector<24x128xbf16>, vector<128x32xbf16>, vector<24x32xf32> -> vector<24x32xf32>
    %c0_4 = arith.constant 0 : index
    %c0_5 = arith.constant 0 : index
    %4 = vector.load %arg4[%c0_4, %c0_5] : memref<24x32xf32, #tpu.memory_space<vmem>>, vector<24x32xf32>
    %5 = arith.addf %3, %4 : vector<24x32xf32>
    %c0_6 = arith.constant 0 : index
    %c0_7 = arith.constant 0 : index
    %c0_8 = arith.constant 0 : index
    %6 = vector.load %arg5[%c0_6, %c0_7, %c0_8] : memref<1x24x32xf32, #tpu.memory_space<vmem>>, vector<1x24x32xf32>
    %7 = vector.shape_cast %6 : vector<1x24x32xf32> to vector<24x32xf32>
    %8 = vector.shape_cast %5 : vector<24x32xf32> to vector<1x24x32xf32>
    tpu.vector_store %arg5[%c0_6, %c0_7, %c0_8], %8 {strides = array<i32>} : memref<1x24x32xf32, #tpu.memory_space<vmem>>, vector<1x24x32xf32>,
    return
  }
  func.func @transform_0(%arg0: i32, %arg1: i32) -> (i32, i32, i32) {
    %c0_i32 = arith.constant 0 : i32
    %c0_i32_0 = arith.constant 0 : i32
    return %arg1, %arg0, %c0_i32 : i32, i32, i32
  }
  func.func @transform_1(%arg0: i32, %arg1: i32) -> (i32, i32) {
    %c0_i32 = arith.constant 0 : i32
    %c0_i32_0 = arith.constant 0 : i32
    %c0_i32_1 = arith.constant 0 : i32
    return %c0_i32, %c0_i32_0 : i32, i32
  }
  func.func @transform_2(%arg0: i32, %arg1: i32) -> (i32, i32) {
    %c0_i32 = arith.constant 0 : i32
    %c0_i32_0 = arith.constant 0 : i32
    return %arg0, %c0_i32 : i32, i32
  }
  func.func @transform_3(%arg0: i32, %arg1: i32) -> (i32, i32, i32) {
    %c0_i32 = arith.constant 0 : i32
    %c0_i32_0 = arith.constant 0 : i32
    return %arg1, %arg0, %c0_i32 : i32, i32, i32
  }
}

</mosaic_0001>

<llo_original>
// kernel: vit_embeddings.1
$region0: #{vit_embeddings.1}
  #allocation0 [shape = 'u32[]', space=smem, size = 0x4, offset = 0x4, fixed_abs, tag = 'smem constant byte address 0x4 - core index']
  #allocation1 [shape = 'u32[144,128]{1,0:T(1,128)}', space=vmem, size = 0x12000, scoped, tag = 'internal scratch']
  %s0 = inlined_call_operand.vmem [shape: bf16[2,24,128], index: 0, kind: input, shape index: {}]
  %s1 = inlined_call_operand.vmem [shape: bf16[128,32], index: 1, kind: input, shape index: {}]
  %s2 = inlined_call_operand.vmem [shape: f32[24,32], index: 2, kind: input, shape index: {}]
  %s3 = inlined_call_operand.vmem [shape: f32[2,24,32], index: 3, kind: output, shape index: {}]
  %s4 = sld [smem:[#allocation0]]
  $region45: #{vit_embeddings.1} parent=0
    _
  %s6 = ssub.s32 1, %s4
  %s7 = scalar_select 0, %s6, %s4
  loop: start=0, step=1, limit=4
  $region2: #{vit_embeddings.1} parent=0 // loop_pre_header
    _
  $region3: #{vit_embeddings.1} parent=0 // loop_header
    %s9 = sphi 0, %s13
    %p10 = scmp.ge.s32.totalorder %s9, 4
    %s16 = sphi 0, %s28
    %s17 = sphi 0, %s24
    %s18 = sphi 0, %s16
    %s19 = sphi 0, %s17
    %s20 = sphi 0, %s18
    %s21 = sphi 0, %s19
    %s33 = sphi 0, %s35
    %s36 = sphi 0, %s33
    %s37 = sphi 0, %s36
    %s53 = sphi 0, %s37
    %s57 = sphi 0, %s57
    %s59 = sphi 0, %s57
    %s60 = sphi 0, %s59
    %s74 = sphi 0, %s60
    %s80 = sphi 0, %s82
    %s83 = sphi 0, %s80
    %s84 = sphi 0, %s83
    %s100 = sphi 0, %s84
    %s108 = sphi 0, %s110
    %s111 = sphi 0, %s108
    %s112 = sphi 0, %s111
    %s128 = sphi 0, %s112
  $region4: #{vit_embeddings.1} parent=0 // loop_header_branch
    %12 = sbr.rel (%p10) target = $region8
  $region5: #{vit_embeddings.1} parent=0 // loop_body
    %s14 = ssub.s32 %s9, 1
    %s15 = ssub.s32 %s9, 2
    %s22 = sadd.s32 1, %s17
    %p23 = scmp.ge.s32.totalorder %s22, 2
    %s24 = scalar_select %p23, 0, %s22
    %s25 = sadd.s32 1, %s16
    %s26 = scalar_select %p23, %s25, %s16
    %p27 = scmp.ge.s32.totalorder %s26, 1
    %s28 = scalar_select %p27, 0, %s26
    %s29 = ssub.s32 %s17, %s24
    %s30 = ssub.s32 %s16, %s28
    %s31 = sor.u32 %s29, %s30
    %p32 = scmp.eq.s32.totalorder %s31, 0
    %s34 = sadd.s32 %s33, 1
    %s35 = scalar_select %p32, %s33, %s34
    %p38 = pneg %p32
    %p39 = scmp.eq.s32.totalorder %s9, 1
    %p40 = por %p38, %p39
    %p41 = scmp.ne.s32.totalorder %s33, %s36
    %p42 = scmp.eq.s32.totalorder %s9, 0
    %p43 = por %p41, %p42
    %p44 = scmp.ne.s32.totalorder %s33, %s36
    %p45 = scmp.eq.s32.totalorder %s14, 1
    %p46 = por %p44, %p45
    %p47 = scmp.ne.s32.totalorder %s36, %s37
    %p48 = scmp.eq.s32.totalorder %s14, 0
    %p49 = por %p47, %p48
    %p50 = scmp.ne.s32.totalorder %s36, %s37
    %p51 = scmp.eq.s32.totalorder %s15, 1
    %p52 = por %p50, %p51
    %p54 = scmp.ne.s32.totalorder %s37, %s53
    %p55 = scmp.eq.s32.totalorder %s15, 0
    %p56 = por %p54, %p55
    %s58 = sadd.s32 %s57, 1
    %p61 = scmp.eq.s32.totalorder %s9, 1
    %p62 = scmp.ne.s32.totalorder %s57, %s59
    %p63 = scmp.eq.s32.totalorder %s9, 0
    %p64 = por %p62, %p63
    %p65 = scmp.ne.s32.totalorder %s57, %s59
    %p66 = scmp.eq.s32.totalorder %s14, 1
    %p67 = por %p65, %p66
    %p68 = scmp.ne.s32.totalorder %s59, %s60
    %p69 = scmp.eq.s32.totalorder %s14, 0
    %p70 = por %p68, %p69
    %p71 = scmp.ne.s32.totalorder %s59, %s60
    %p72 = scmp.eq.s32.totalorder %s15, 1
    %p73 = por %p71, %p72
    %p75 = scmp.ne.s32.totalorder %s60, %s74
    %p76 = scmp.eq.s32.totalorder %s15, 0
    %p77 = por %p75, %p76
    %s78 = ssub.s32 %s16, %s28
    %p79 = scmp.eq.s32.totalorder %s78, 0
    %s81 = sadd.s32 %s80, 1
    %s82 = scalar_select %p79, %s80, %s81
    %p85 = pneg %p79
    %p86 = scmp.eq.s32.totalorder %s9, 1
    %p87 = por %p85, %p86
    %p88 = scmp.ne.s32.totalorder %s80, %s83
    %p89 = scmp.eq.s32.totalorder %s9, 0
    %p90 = por %p88, %p89
    %p91 = scmp.ne.s32.totalorder %s80, %s83
    %p92 = scmp.eq.s32.totalorder %s14, 1
    %p93 = por %p91, %p92
    %p94 = scmp.ne.s32.totalorder %s83, %s84
    %p95 = scmp.eq.s32.totalorder %s14, 0
    %p96 = por %p94, %p95
    %p97 = scmp.ne.s32.totalorder %s83, %s84
    %p98 = scmp.eq.s32.totalorder %s15, 1
    %p99 = por %p97, %p98
    %p101 = scmp.ne.s32.totalorder %s84, %s100
    %p102 = scmp.eq.s32.totalorder %s15, 0
    %p103 = por %p101, %p102
    %s104 = ssub.s32 %s17, %s24
    %s105 = ssub.s32 %s16, %s28
    %s106 = sor.u32 %s104, %s105
    %p107 = scmp.eq.s32.totalorder %s106, 0
    %s109 = sadd.s32 %s108, 1
    %s110 = scalar_select %p107, %s108, %s109
    %p113 = pneg %p107
    %p114 = scmp.eq.s32.totalorder %s9, 1
    %p115 = por %p113, %p114
    %p116 = scmp.ne.s32.totalorder %s108, %s111
    %p117 = scmp.eq.s32.totalorder %s9, 0
    %p118 = por %p116, %p117
    %p119 = scmp.ne.s32.totalorder %s108, %s111
    %p120 = scmp.eq.s32.totalorder %s14, 1
    %p121 = por %p119, %p120
    %p122 = scmp.ne.s32.totalorder %s111, %s112
    %p123 = scmp.eq.s32.totalorder %s14, 0
    %p124 = por %p122, %p123
    %p125 = scmp.ne.s32.totalorder %s111, %s112
    %p126 = scmp.eq.s32.totalorder %s15, 1
    %p127 = por %p125, %p126
    %p129 = scmp.ne.s32.totalorder %s112, %s128
    %p130 = scmp.eq.s32.totalorder %s15, 0
    %p131 = por %p129, %p130
    %p132 = scmp.le.s32.totalorder 1, %s9
    %p133 = scmp.lt.s32.totalorder %s9, 3
    %p134 = pnand %p132, %p133
    %p135 = pneg %p134
    // Predicated region
    $region9: #{vit_embeddings.1} parent=5 // pred_check
      _
    $region10: #{vit_embeddings.1} parent=5 // pred_check_branch
      %137 = sbr.rel (%p134) target = $region12
    $region11: #{vit_embeddings.1} parent=5 // pred_region
      %s138 = ssub.s32 %s9, 1
      // Predicated region
      $region13: #{vit_embeddings.1} parent=11 // pred_check
        %p139 = pneg %p70
      $region14: #{vit_embeddings.1} parent=11 // pred_check_branch
        %141 = sbr.rel (%p139) target = $region16
      $region15: #{vit_embeddings.1} parent=11 // pred_region
        _
      $region16: #{vit_embeddings.1} parent=11 // pred_fallthru
        _
      // Predicated region
      $region17: #{vit_embeddings.1} parent=11 // pred_check
        %p142 = pneg %p96
      $region18: #{vit_embeddings.1} parent=11 // pred_check_branch
        %144 = sbr.rel (%p142) target = $region20
      $region19: #{vit_embeddings.1} parent=11 // pred_region
        %s145 = smul.u32 3, %s18
        %p146 = scmp.lt.s32.totalorder %s145, 2
        %s147 = scalar_select %p146, %s145, 2
        %s148 = smul.addr %s147, 8
        %s149 = scalar_lea.vmem %s2, %s148
        %s150 = smul.u32 3, %s18
      $region20: #{vit_embeddings.1} parent=11 // pred_fallthru
        _
    $region12: #{vit_embeddings.1} parent=5 // pred_fallthru
      _
    %p151 = scmp.lt.s32.totalorder %s9, 2
    // Predicated region
    $region21: #{vit_embeddings.1} parent=5 // pred_check
      %p152 = pneg %p151
    $region22: #{vit_embeddings.1} parent=5 // pred_check_branch
      %154 = sbr.rel (%p152) target = $region24
    $region23: #{vit_embeddings.1} parent=5 // pred_region
      // Predicated region
      $region25: #{vit_embeddings.1} parent=23 // pred_check
        %p155 = pneg %p43
      $region26: #{vit_embeddings.1} parent=23 // pred_check_branch
        %157 = sbr.rel (%p155) target = $region28
      $region27: #{vit_embeddings.1} parent=23 // pred_region
        %s158 = smul.u32 3, %s16
        %p159 = scmp.lt.s32.totalorder %s17, 1
        %s160 = scalar_select %p159, %s17, 1
        %p161 = scmp.lt.s32.totalorder %s158, 2
        %s162 = scalar_select %p161, %s158, 2
        %s163 = smul.addr %s160, 3
        %s164 = sadd.s32 %s162, %s163
        %s165 = smul.addr %s164, 4
        %s166 = scalar_lea.vmem %s0, %s165
        %s167 = smul.u32 3, %s16
      $region28: #{vit_embeddings.1} parent=23 // pred_fallthru
        _
    $region24: #{vit_embeddings.1} parent=5 // pred_fallthru
      _
    %p168 = scmp.le.s32.totalorder 1, %s9
    %p169 = scmp.lt.s32.totalorder %s9, 3
    %p170 = pnand %p168, %p169
    %p171 = pneg %p170
    // Predicated region
    $region29: #{vit_embeddings.1} parent=5 // pred_check
      _
    $region30: #{vit_embeddings.1} parent=5 // pred_check_branch
      %173 = sbr.rel (%p170) target = $region32
    $region31: #{vit_embeddings.1} parent=5 // pred_region
      %s174 = ssub.s32 %s9, 1
      %s175 = smul.u32 3, %s18
      %p176 = scmp.lt.s32.totalorder %s19, 1
      %s177 = scalar_select %p176, %s19, 1
      %p178 = scmp.lt.s32.totalorder %s175, 2
      %s179 = scalar_select %p178, %s175, 2
      %s180 = smul.addr %s177, 3
      %s181 = sadd.s32 %s179, %s180
      %s182 = smul.addr %s181, 4
      %s183 = scalar_lea.vmem %s0, %s182
      %p184 = pneg %p49
      %p185 = pneg %p46
      %p186 = pneg %p70
      %p187 = pneg %p67
      %s188 = smul.u32 3, %s18
      %p189 = scmp.lt.s32.totalorder %s188, 2
      %s190 = scalar_select %p189, %s188, 2
      %s191 = smul.addr %s190, 8
      %s192 = scalar_lea.vmem %s2, %s191
      %p193 = pneg %p96
      %p194 = pneg %p93
      %p195 = pneg %p124
      %p196 = pneg %p121
      %s197 = smul.u32 3, %s18
      %p198 = scmp.lt.s32.totalorder %s19, 1
      %s199 = scalar_select %p198, %s19, 1
      %p200 = scmp.lt.s32.totalorder %s197, 2
      %s201 = scalar_select %p200, %s197, 2
      %s202 = smul.addr %s199, 3
      %s203 = sadd.s32 %s201, %s202
      %s204 = smul.addr %s203, 8
      %s205 = scalar_lea.vmem %s3, %s204
      %s206 = smul.u32 3, %s18
      %p207 = scmp.lt.s32.totalorder %s19, 1
      %s208 = scalar_select %p207, %s19, 1
      %p209 = scmp.lt.s32.totalorder %s206, 2
      %s210 = scalar_select %p209, %s206, 2
      %s211 = smul.addr %s208, 3
      %s212 = sadd.s32 %s210, %s211
      %s213 = smul.addr %s212, 4
      %s214 = scalar_lea.vmem %s0, %s213
      %s215 = smul.u32 3, %s18
      %s216 = smul.u32 3, %s18
      %p217 = scmp.lt.s32.totalorder %s216, 2
      %s218 = scalar_select %p217, %s216, 2
      %s219 = smul.addr %s218, 8
      %s220 = scalar_lea.vmem %s2, %s219
      %s221 = smul.u32 3, %s18
      %s222 = smul.u32 3, %s18
      %p223 = scmp.lt.s32.totalorder %s19, 1
      %s224 = scalar_select %p223, %s19, 1
      %p225 = scmp.lt.s32.totalorder %s222, 2
      %s226 = scalar_select %p225, %s222, 2
      %s227 = smul.addr %s224, 3
      %s228 = sadd.s32 %s226, %s227
      %s229 = smul.addr %s228, 8
      %s230 = scalar_lea.vmem %s3, %s229
      %s231 = smul.u32 3, %s18
      %v233 = vld [vmem:[%s214] sm:$0xf]
      %v234 = vld [vmem:[%s214 + $0x4] sm:$0xf]
      %v235 = vld [vmem:[%s214 + $0x8] sm:$0xf]
      %v236 = vld [vmem:[%s1] sm:$0xf]
      %v237 = vld [vmem:[%s1 + $0x4] sm:$0xf]
      %v238 = vld [vmem:[%s1 + $0x8] sm:$0xf]
      %v239 = vld [vmem:[%s1 + $0xc] sm:$0xf]
      %v240 = vld [vmem:[%s1 + $0x10] sm:$0xf]
      %v241 = vld [vmem:[%s1 + $0x14] sm:$0xf]
      %v242 = vld [vmem:[%s1 + $0x18] sm:$0xf]
      %v243 = vld [vmem:[%s1 + $0x1c] sm:$0xf]
      %v244 = vld [vmem:[%s1 + $0x20] sm:$0xf]
      %v245 = vld [vmem:[%s1 + $0x24] sm:$0xf]
      %v246 = vld [vmem:[%s1 + $0x28] sm:$0xf]
      %v247 = vld [vmem:[%s1 + $0x2c] sm:$0xf]
      %v248 = vld [vmem:[%s1 + $0x30] sm:$0xf]
      %v249 = vld [vmem:[%s1 + $0x34] sm:$0xf]
      %v250 = vld [vmem:[%s1 + $0x38] sm:$0xf]
      %v251 = vld [vmem:[%s1 + $0x3c] sm:$0xf]
      %v252 = vld [vmem:[%s220] sm:$0xff]
      %v253 = vld [vmem:[%s220 + $0x8] sm:$0xff]
      %v254 = vld [vmem:[%s220 + $0x10] sm:$0xff]
      %v258 = vunpack.c.l.b16 %v233
      %v259 = vunpack.c.l.b16 %v234
      %v260 = vunpack.c.l.b16 %v235
      %v261 = vpack.c.b16 %v259, %v258
      %v262 = vpack.c.b16 %v260, %v260
      %v281 = vunpack.c.l.b16 %v236
      %v282 = vunpack.c.l.b16 %v237
      %v283 = vunpack.c.l.b16 %v238
      %v284 = vunpack.c.l.b16 %v239
      %v285 = vunpack.c.l.b16 %v240
      %v286 = vunpack.c.l.b16 %v241
      %v287 = vunpack.c.l.b16 %v242
      %v288 = vunpack.c.l.b16 %v243
      %v289 = vunpack.c.l.b16 %v244
      %v290 = vunpack.c.l.b16 %v245
      %v291 = vunpack.c.l.b16 %v246
      %v292 = vunpack.c.l.b16 %v247
      %v293 = vunpack.c.l.b16 %v248
      %v294 = vunpack.c.l.b16 %v249
      %v295 = vunpack.c.l.b16 %v250
      %v296 = vunpack.c.l.b16 %v251
      %v297 = vpack.c.b16 %v282, %v281
      %v298 = vpack.c.b16 %v284, %v283
      %v299 = vpack.c.b16 %v286, %v285
      %v300 = vpack.c.b16 %v288, %v287
      %v301 = vpack.c.b16 %v290, %v289
      %v302 = vpack.c.b16 %v292, %v291
      %v303 = vpack.c.b16 %v294, %v293
      %v304 = vpack.c.b16 %v296, %v295
      %313 = vmatprep.subr.bf16.mxu0 0
      %314 = vmatpush1.bf16.msra.mxu0 %v297
      %315 = vmatprep.subr.bf16.mxu0 0
      %316 = vmatpush1.bf16.msra.mxu0 %v298
      %317 = vmatprep.subr.bf16.mxu0 0
      %318 = vmatpush1.bf16.msra.mxu0 %v299
      %319 = vmatprep.subr.bf16.mxu0 0
      %320 = vmatpush1.bf16.msra.mxu0 %v300
      %321 = vmatprep.subr.bf16.mxu0 0
      %322 = vmatpush1.bf16.msra.mxu0 %v301
      %323 = vmatprep.subr.bf16.mxu0 0
      %324 = vmatpush1.bf16.msra.mxu0 %v302
      %325 = vmatprep.subr.bf16.mxu0 0
      %326 = vmatpush1.bf16.msra.mxu0 %v303
      %327 = vmatprep.subr.bf16.mxu0 0
      %328 = vmatpush1.bf16.msra.mxu0 %v304
      %329 = vmatprep.subr.bf16.mxu0 0
      %330 = vmatpush1.bf16.msra.mxu0 0
      %331 = vmatprep.subr.bf16.mxu0 0
      %332 = vmatpush1.bf16.msra.mxu0 0
      %333 = vmatprep.subr.bf16.mxu0 0
      %334 = vmatpush1.bf16.msra.mxu0 0
      %335 = vmatprep.subr.bf16.mxu0 0
      %336 = vmatpush1.bf16.msra.mxu0 0
      %337 = vmatprep.subr.bf16.mxu0 0
      %338 = vmatpush1.bf16.msra.mxu0 0
      %339 = vmatprep.subr.bf16.mxu0 0
      %340 = vmatpush1.bf16.msra.mxu0 0
      %341 = vmatprep.subr.bf16.mxu0 0
      %342 = vmatpush1.bf16.msra.mxu0 0
      %343 = vmatprep.subr.bf16.mxu0 0
      %344 = vmatpush1.bf16.msra.mxu0 0
      %345 = vmatprep.mubr.bf16.mxu0 0
      %346 = vmatmul.mubr.bf16.gmra.mrb[0].mxu0 %v261
      %v347 = vpop.f32.mrb[0].mxu0
      %v348 = vadd.f32 %v252, %v347
      %v349 = vpop.f32.mrb[0].mxu0
      %v350 = vpop.f32.mrb[0].mxu0
      %v351 = vadd.f32 %v253, %v350
      %v352 = vpop.f32.mrb[0].mxu0
      %353 = vmatprep.mubr.bf16.mxu0 0
      %354 = vmatmul.mubr.bf16.gmra.mrb[0].mxu0 %v262
      %v355 = vpop.f32.mrb[0].mxu0
      %v356 = vadd.f32 %v254, %v355
      %v357 = vpop.f32.mrb[0].mxu0
      %v358 = vpop.f32.mrb[0].mxu0
      %v359 = vpop.f32.mrb[0].mxu0
      %360 = vdwg.mxu0
      %vm361 = vcmask 261120
      %362 = vst.msk [vmem:[%s230] sm:$0xff] %vm361, %v348
      %363 = vst.msk [vmem:[%s230 + $0x8] sm:$0xff] %vm361, %v351
      %364 = vst.msk [vmem:[%s230 + $0x10] sm:$0xff] %vm361, %v356
      %s365 = smul.u32 3, %s18
      %p366 = scmp.lt.s32.totalorder %s19, 1
      %s367 = scalar_select %p366, %s19, 1
      %p368 = scmp.lt.s32.totalorder %s365, 2
      %s369 = scalar_select %p368, %s365, 2
      %s370 = smul.addr %s367, 3
      %s371 = sadd.s32 %s369, %s370
      %s372 = smul.addr %s371, 8
      %s373 = scalar_lea.vmem %s3, %s372
      // Predicated region
      $region33: #{vit_embeddings.1} parent=31 // pred_check
        %p374 = pneg %p121
      $region34: #{vit_embeddings.1} parent=31 // pred_check_branch
        %376 = sbr.rel (%p374) target = $region36
      $region35: #{vit_embeddings.1} parent=31 // pred_region
        %s377 = smul.u32 3, %s18
      $region36: #{vit_embeddings.1} parent=31 // pred_fallthru
        _
    $region32: #{vit_embeddings.1} parent=5 // pred_fallthru
      _
    %p378 = scmp.le.s32.totalorder 2, %s9
    // Predicated region
    $region37: #{vit_embeddings.1} parent=5 // pred_check
      %p379 = pneg %p378
    $region38: #{vit_embeddings.1} parent=5 // pred_check_branch
      %381 = sbr.rel (%p379) target = $region40
    $region39: #{vit_embeddings.1} parent=5 // pred_region
      %s382 = ssub.s32 %s9, 2
      // Predicated region
      $region41: #{vit_embeddings.1} parent=39 // pred_check
        %p383 = pneg %p127
      $region42: #{vit_embeddings.1} parent=39 // pred_check_branch
        %385 = sbr.rel (%p383) target = $region44
      $region43: #{vit_embeddings.1} parent=39 // pred_region
        %s386 = smul.u32 3, %s20
        %p387 = scmp.lt.s32.totalorder %s21, 1
        %s388 = scalar_select %p387, %s21, 1
        %p389 = scmp.lt.s32.totalorder %s386, 2
        %s390 = scalar_select %p389, %s386, 2
        %s391 = smul.addr %s388, 3
        %s392 = sadd.s32 %s390, %s391
        %s393 = smul.addr %s392, 8
        %s394 = scalar_lea.vmem %s3, %s393
      $region44: #{vit_embeddings.1} parent=39 // pred_fallthru
        _
    $region40: #{vit_embeddings.1} parent=5 // pred_fallthru
      _
  $region6: #{vit_embeddings.1} parent=0 // loop_footer
    %s13 = sadd.s32 1, %s9
  $region7: #{vit_embeddings.1} parent=0 // loop_footer_branch
    %8 = sbr.rel target = $region3
  $region8: #{vit_embeddings.1} parent=0 // loop_exit
    _

</llo_original>
